<compile_context>
chip_gen: v7x
topology: tpu7x:2x2x1
jax: 0.10.0
libtpu: 0.0.40
codegen_flags: <defaults>
</compile_context>

<pallas_src>
import functools

import jax
import jax.numpy as jnp
from jax.experimental import pallas as pl
from jax.experimental.pallas import tpu as pltpu


def _rgcn_kernel(msk_ref, aidx_ref, coeff_ref, a_ref, xb_ref, inv_ref,
                 init_ref, o_ref, acc_ref, *, num_bases):
    """Grid = (dst tiles, src tiles, relations); acc accumulates over (k, r)."""
    k = pl.program_id(1)
    r = pl.program_id(2)
    gk = pl.num_programs(1)
    gr = pl.num_programs(2)

    # First reduction step for this dst tile: load the precomputed (exact f32)
    # self-loop + bias block.
    @pl.when(jnp.logical_and(k == 0, r == 0))
    def _init():
        acc_ref[...] = init_ref[...]

    # Flattened grid step -> tile-occupancy mask (scalar-prefetched, in SMEM).
    t = (pl.program_id(0) * gk + k) * gr + r

    @pl.when(msk_ref[t] > 0)
    def _acc():
        # Rebuild XW[r] from the basis products with VPU scaled adds; the
        # per-relation coefficients arrive lane-broadcast as (NB, 1, f_pad).
        xw = coeff_ref[0] * xb_ref[0].astype(jnp.float32)
        for b in range(1, num_bases):
            xw += coeff_ref[b] * xb_ref[b].astype(jnp.float32)
        # Binary int8 adjacency -> bf16 for the MXU (exact 0/1 operand); the
        # two-step cast keeps the lowering on well-supported convert paths.
        a_bf = a_ref[...].astype(jnp.float32).astype(jnp.bfloat16)
        msg = jnp.dot(a_bf, xw.astype(jnp.bfloat16),
                      preferred_element_type=jnp.float32)
        # Right-norm 1/deg applied per (relation, dst row) on the VPU.
        acc_ref[...] += inv_ref[...] * msg

    # Last reduction step: relu + one lane-dense writeback.
    @pl.when(jnp.logical_and(k == gk - 1, r == gr - 1))
    def _fin():
        o_ref[...] = jnp.maximum(acc_ref[...], 0.0).astype(o_ref.dtype)


def _round_up(v, m):
    return ((v + m - 1) // m) * m


def _pick_tile(dim, candidates):
    """Largest candidate not exceeding the 128-aligned dimension."""
    aligned = _round_up(dim, 128)
    for c in candidates:
        if c <= aligned:
            return c
    return 128


def _pad_axis(x, axis, target):
    cur = x.shape[axis]
    if cur == target:
        return x
    pads = [(0, 0)] * x.ndim
    pads[axis] = (0, target - cur)
    return jnp.pad(x, pads)


def rel_graph_conv_layer(adj, x, self_loop_weight, bias, *,
                         basis=None, coeff=None, weight=None, inv_deg=None):
    """R-GCN layer forward.

    adj:  (R, N_dst, N_src) *binary* adjacency (int8 preferred; the nonzero
          pattern of any dtype is used).  The GraphConv norm='right' factor is
          NOT baked in — it is applied in-kernel via `inv_deg`.
    x:    (N_src, F_in) source features (dst nodes are rows [:N_dst]).
    self_loop_weight: (F_in, F_out); bias: (F_out,).
    Relation weights either as `weight` (R, F_in, F_out) or as the WeightBasis
    pair `basis` (num_bases, F_in, F_out) + `coeff` (R, num_bases).
    inv_deg: optional (R, N_dst) 1/max(in_degree, 1); computed here if None.
    Returns relu(sum_r A_norm[r] @ (X @ W[r]) + X_dst @ W_self + bias).
    """
    R, N_dst, N_src = adj.shape

    # Connectivity as binary int8 (compressed HBM stream, exact MXU operand).
    adj_i8 = adj if adj.dtype == jnp.int8 else (adj != 0).astype(jnp.int8)

    # WeightBasis exploitation: only num_bases basis products are streamed;
    # a plain per-relation `weight` is just the num_bases == R special case.
    if basis is None:
        basis = weight
        coeff = jnp.eye(R, dtype=jnp.float32)
    NB = basis.shape[0]
    F_out = basis.shape[-1]

    # Lane-dense output: pad F_out to a multiple of 128 *before* the einsums so
    # XB / init are born padded (no full-array pad pass afterwards).
    f_pad = _round_up(F_out, 128)
    basis_p = _pad_axis(basis.astype(jnp.float32), 2, f_pad)
    wself_p = _pad_axis(self_loop_weight.astype(jnp.float32), 1, f_pad)
    bias_p = _pad_axis(jnp.reshape(bias, (-1,)).astype(jnp.float32), 0, f_pad)

    # Per-chip VMEM budget (64 MiB on v7x, 128 MiB on v5e/v6e).
    try:
        vmem_cap = int(pltpu.get_tpu_info().vmem_capacity_bytes)
    except Exception:
        vmem_cap = 64 * 1024 * 1024
    vmem_limit = int(vmem_cap * 0.75)
    big_vmem = vmem_cap >= 96 * 1024 * 1024
    tm_cands = (2048, 1024, 512, 256, 128) if big_vmem else (512, 256, 128)
    tk_cands = (2048, 1024, 512, 256, 128)

    tm = _pick_tile(N_dst, tm_cands)
    tk = _pick_tile(N_src, tk_cands)
    out_isz = jnp.dtype(x.dtype).itemsize

    def _tile_bytes(tm_, tk_):
        a_t = 2 * tm_ * tk_ * 1                  # double-buffered int8 A tile
        a_tmp = tm_ * tk_ * 6                    # f32 + bf16 cast temporaries
        xb_t = 2 * NB * tk_ * f_pad * 2          # double-buffered bf16 XB block
        xw_tmp = tk_ * f_pad * 6                 # f32 + bf16 XW temporaries
        init_t = 2 * tm_ * f_pad * 4             # f32 self-loop + bias block
        out_t = 2 * tm_ * f_pad * out_isz
        acc_t = tm_ * f_pad * 4
        inv_t = 2 * tm_ * 4
        return a_t + a_tmp + xb_t + xw_tmp + init_t + out_t + acc_t + inv_t

    budget = int(0.85 * vmem_limit)              # tile bytes already include 2x buffering
    while _tile_bytes(tm, tk) > budget and tk > 128:
        tk //= 2
    while _tile_bytes(tm, tk) > budget and tm > 128:
        tm //= 2

    # Pad node counts to tile multiples: zero rows/cols are exact no-ops and
    # their all-zero tiles are skipped by the occupancy mask below.
    N_dst_p = _round_up(N_dst, tm)
    N_src_p = _round_up(N_src, tk)
    Gi, Gk, Gr = N_dst_p // tm, N_src_p // tk, R
    T = Gi * Gk * Gr

    adj_p = _pad_axis(_pad_axis(adj_i8, 1, N_dst_p), 2, N_src_p)

    # Right-norm factored out of the adjacency: 1/max(deg, 1) per (r, dst row).
    if inv_deg is None:
        deg = jnp.sum(adj_i8, axis=2, dtype=jnp.int32)
        inv_deg = 1.0 / jnp.maximum(deg, 1).astype(jnp.float32)
    inv_p = _pad_axis(inv_deg.astype(jnp.float32), 1, N_dst_p)[..., None]

    # Basis products XB = X @ basis[b]: bf16 inputs, f32 MXU accumulation,
    # emitted directly as bf16 and already F_out-padded.
    x_src = _pad_axis(x.astype(jnp.bfloat16), 0, N_src_p)
    xb = jnp.einsum('si,bio->bso', x_src, basis_p.astype(jnp.bfloat16),
                    preferred_element_type=jnp.float32).astype(jnp.bfloat16)

    # Self-loop + bias block, exact f32, loaded once per dst tile in-kernel.
    x_dst = _pad_axis(x[:N_dst].astype(jnp.float32), 0, N_dst_p)
    init = x_dst @ wself_p + bias_p[None, :]

    # Per-relation coefficients lane-broadcast so the kernel uses plain vector
    # multiplies (no scalar extraction needed): (R, NB, 1, f_pad) f32, tiny.
    coeff_vm = jnp.broadcast_to(
        coeff.astype(jnp.float32)[:, :, None, None], (R, NB, 1, f_pad))

    # Tile occupancy mask in grid order (i, k, r) plus a redirect table that
    # points empty steps at the previously fetched adjacency block so their
    # DMA is skipped (Pallas elides copies when the block index is unchanged).
    occ = jnp.any(adj_p.reshape(R, Gi, tm, Gk, tk) != 0, axis=(2, 4))  # (R,Gi,Gk)
    mask_flat = jnp.transpose(occ, (1, 2, 0)).reshape(T).astype(jnp.int32)
    steps = jnp.arange(T, dtype=jnp.int32)
    last_live = jax.lax.cummax(jnp.where(mask_flat > 0, steps, -1), axis=0)
    src_step = jnp.where(last_live >= 0, last_live, steps)
    i_of = jnp.repeat(jnp.arange(Gi, dtype=jnp.int32), Gk * Gr)
    k_of = jnp.tile(jnp.repeat(jnp.arange(Gk, dtype=jnp.int32), Gr), Gi)
    r_of = jnp.tile(jnp.arange(Gr, dtype=jnp.int32), Gi * Gk)
    aidx = jnp.stack([jnp.take(r_of, src_step),
                      jnp.take(i_of, src_step),
                      jnp.take(k_of, src_step)]).astype(jnp.int32)    # (3, T)

    def _a_map(i, k, r, msk, aidx_):
        t = (i * Gk + k) * Gr + r
        return aidx_[0, t], aidx_[1, t], aidx_[2, t]

    grid = (Gi, Gk, Gr)

    out_p = pl.pallas_call(
        functools.partial(_rgcn_kernel, num_bases=NB),
        out_shape=jax.ShapeDtypeStruct((N_dst_p, f_pad), x.dtype),
        grid_spec=pltpu.PrefetchScalarGridSpec(
            num_scalar_prefetch=2,
            grid=grid,
            in_specs=[
                # lane-broadcast coefficients: (NB, 1, f_pad) per relation.
                pl.BlockSpec((pl.Squeezed(), NB, 1, f_pad),
                             lambda i, k, r, m, a: (r, 0, 0, 0)),
                # binary int8 adjacency A[r]: (tm, tk) tile; empty tiles keep
                # the previous block index -> DMA skipped.
                pl.BlockSpec((pl.Squeezed(), tm, tk), _a_map),
                # basis products XB: one (NB, tk, f_pad) block per src tile,
                # reused across all relations (r innermost).
                pl.BlockSpec((NB, tk, f_pad), lambda i, k, r, m, a: (0, k, 0)),
                # per-(relation, dst-row) inverse degree.
                pl.BlockSpec((pl.Squeezed(), tm, 1),
                             lambda i, k, r, m, a: (r, i, 0)),
                # precomputed self-loop + bias block.
                pl.BlockSpec((tm, f_pad), lambda i, k, r, m, a: (i, 0)),
            ],
            out_specs=pl.BlockSpec((tm, f_pad), lambda i, k, r, m, a: (i, 0)),
            scratch_shapes=[pltpu.VMEM((tm, f_pad), jnp.float32)],
        ),
        compiler_params=pltpu.CompilerParams(
            # dst tiles are independent -> megacore-parallel (2 TCs on v7x,
            # no-op on v5e/v6e); src tiles + relations accumulate into the
            # same output tile and stay "arbitrary".
            dimension_semantics=("parallel", "arbitrary", "arbitrary"),
            vmem_limit_bytes=vmem_limit,
        ),
    )(mask_flat, aidx, coeff_vm, adj_p, xb, inv_p, init)

    return out_p[:N_dst, :F_out]


if __name__ == "__main__":
    key = jax.random.PRNGKey(0)

    # Small shapes consistent with the module's __init__ (single node type).
    N = 64                       # nodes (N_dst == N_src, non-block graph)
    F_in, F_out = 32, 32
    rel_names = ["cites", "writes", "affiliated_with"]
    R = len(rel_names)
    num_bases = 2                # < R -> WeightBasis decomposition path

    k_feat, k_adj, k_basis, k_coef, k_self = jax.random.split(key, 5)

    # Node features.
    x = jax.random.normal(k_feat, (N, F_in), dtype=jnp.float32)

    # Random per-relation graphs, shipped as *binary int8* adjacency
    # (the right-norm is applied inside the kernel via inv_deg).
    adj = jax.random.bernoulli(k_adj, 0.1, (R, N, N)).astype(jnp.int8)

    # Deterministic parameter init mirroring the torch module.
    gain = jnp.sqrt(2.0)                               # calculate_gain('relu')

    def xavier(k, shape, fan_in, fan_out):
        bound = gain * jnp.sqrt(6.0 / (fan_in + fan_out))
        return jax.random.uniform(k, shape, jnp.float32, -bound, bound)

    # WeightBasis: W[r] = sum_b coeff[r, b] * basis[b]
    basis = xavier(k_basis, (num_bases, F_in, F_out), F_in, F_out)
    coeff = xavier(k_coef, (R, num_bases), R, num_bases)
    self_loop_weight = xavier(k_self, (F_in, F_out), F_in, F_out)
    bias = jnp.zeros((F_out,), dtype=jnp.float32)      # nn.init.zeros_

    out = rel_graph_conv_layer(adj, x, self_loop_weight, bias,
                               basis=basis, coeff=coeff)
    out = jax.block_until_ready(out)

    # Plain-JAX (f32, materialized-weight) reference for sanity.
    a_f = adj.astype(jnp.float32)
    deg = jnp.sum(a_f, axis=2, keepdims=True)          # in-degree of dst nodes
    a_norm = a_f / jnp.maximum(deg, 1.0)               # GraphConv norm='right'
    weight = jnp.einsum("rb,bio->rio", coeff, basis)
    ref = jnp.einsum("rds,sf,rfo->do", a_norm, x, weight)
    ref = ref + x @ self_loop_weight + bias
    ref = jnp.maximum(ref, 0.0)

    assert out.shape == (N, F_out)
    # Exact int8 adjacency + f32 accumulation; only XB / XW are bf16.
    assert jnp.allclose(out, ref, rtol=2e-2, atol=2e-2), float(
        jnp.max(jnp.abs(out - ref)))

    print("KERNEL_OK")
</pallas_src>

<mosaic_0001>
module attributes {stable_mosaic.version = 11 : i64} {
  func.func @_rgcn_kernel(%arg0: i32, %arg1: i32, %arg2: i32, %arg3: memref<3xi32, #tpu.memory_space<smem>>, %arg4: memref<3x3xi32, #tpu.memory_space<smem>>, %arg5: memref<1x2x1x128xf32, #tpu.memory_space<vmem>>, %arg6: memref<1x128x128xi8, #tpu.memory_space<vmem>>, %arg7: memref<2x128x128xbf16, #tpu.memory_space<vmem>>, %arg8: memref<1x128x1xf32, #tpu.memory_space<vmem>>, %arg9: memref<128x128xf32, #tpu.memory_space<vmem>>, %arg10: memref<128x128xf32, #tpu.memory_space<vmem>>, %arg11: memref<128x128xf32, #tpu.memory_space<vmem>>) attributes {dimension_semantics = [#tpu.dimension_semantics<parallel>, #tpu.dimension_semantics<arbitrary>, #tpu.dimension_semantics<arbitrary>], iteration_bounds = array<i64: 1, 1, 3>, scalar_prefetch = 2 : i64, scratch_operands = 1 : i64, tpu.core_type = #tpu.core_type<tc>, window_params = [{transform_indices = @transform_0, window_bounds = array<i64: 1, 2, 1, 128>}, {transform_indices = @transform_1, window_bounds = array<i64: 1, 128, 128>}, {transform_indices = @transform_2, window_bounds = array<i64: 2, 128, 128>}, {transform_indices = @transform_3, window_bounds = array<i64: 1, 128, 1>}, {transform_indices = @transform_4, window_bounds = array<i64: 128, 128>}, {transform_indices = @transform_5, window_bounds = array<i64: 128, 128>}]} {
    %c0_i32 = arith.constant 0 : i32
    %0 = arith.cmpi eq, %arg1, %c0_i32 : i32
    %c0_i32_0 = arith.constant 0 : i32
    %1 = arith.cmpi eq, %arg2, %c0_i32_0 : i32
    %2 = arith.andi %0, %1 : i1
    %3 = arith.extui %2 : i1 to i32
    %c0_i32_1 = arith.constant 0 : i32
    %4 = arith.cmpi ne, %3, %c0_i32_1 : i32
    scf.if %4 {
      %c0 = arith.constant 0 : index
      %c0_6 = arith.constant 0 : index
      %19 = vector.load %arg9[%c0, %c0_6] : memref<128x128xf32, #tpu.memory_space<vmem>>, vector<128x128xf32>
      %c0_7 = arith.constant 0 : index
      %c0_8 = arith.constant 0 : index
      %20 = vector.load %arg11[%c0_7, %c0_8] : memref<128x128xf32, #tpu.memory_space<vmem>>, vector<128x128xf32>
      tpu.vector_store %arg11[%c0_7, %c0_8], %19 {strides = array<i32>} : memref<128x128xf32, #tpu.memory_space<vmem>>, vector<128x128xf32>,
    } else {
    }
    %c1_i32 = arith.constant 1 : i32
    %5 = arith.muli %arg0, %c1_i32 : i32
    %6 = arith.addi %5, %arg1 : i32
    %c3_i32 = arith.constant 3 : i32
    %7 = arith.muli %6, %c3_i32 : i32
    %8 = arith.addi %7, %arg2 : i32
    %9 = arith.index_cast %8 : i32 to index
    %10 = memref.load %arg3[%9] : memref<3xi32, #tpu.memory_space<smem>>
    %c0_i32_2 = arith.constant 0 : i32
    %11 = arith.cmpi sgt, %10, %c0_i32_2 : i32
    %12 = arith.extui %11 : i1 to i32
    %c0_i32_3 = arith.constant 0 : i32
    %13 = arith.cmpi ne, %12, %c0_i32_3 : i32
    scf.if %13 {
      %c0 = arith.constant 0 : index
      %c0_6 = arith.constant 0 : index
      %c0_7 = arith.constant 0 : index
      %c0_8 = arith.constant 0 : index
      %19 = vector.load %arg5[%c0, %c0_6, %c0_7, %c0_8] : memref<1x2x1x128xf32, #tpu.memory_space<vmem>>, vector<1x1x1x128xf32>
      %20 = vector.shape_cast %19 : vector<1x1x1x128xf32> to vector<1x128xf32>
      %c0_9 = arith.constant 0 : index
      %c0_10 = arith.constant 0 : index
      %c0_11 = arith.constant 0 : index
      %21 = vector.load %arg7[%c0_9, %c0_10, %c0_11] : memref<2x128x128xbf16, #tpu.memory_space<vmem>>, vector<1x128x128xbf16>
      %22 = vector.shape_cast %21 : vector<1x128x128xbf16> to vector<128x128xbf16>
      %23 = arith.extf %22 : vector<128x128xbf16> to vector<128x128xf32>
      %24 = vector.broadcast %20 : vector<1x128xf32> to vector<128x128xf32>
      %25 = arith.mulf %24, %23 : vector<128x128xf32>
      %c0_12 = arith.constant 0 : index
      %c1 = arith.constant 1 : index
      %c0_13 = arith.constant 0 : index
      %c0_14 = arith.constant 0 : index
      %26 = vector.load %arg5[%c0_12, %c1, %c0_13, %c0_14] : memref<1x2x1x128xf32, #tpu.memory_space<vmem>>, vector<1x1x1x128xf32>
      %27 = vector.shape_cast %26 : vector<1x1x1x128xf32> to vector<1x128xf32>
      %c1_15 = arith.constant 1 : index
      %c0_16 = arith.constant 0 : index
      %c0_17 = arith.constant 0 : index
      %28 = vector.load %arg7[%c1_15, %c0_16, %c0_17] : memref<2x128x128xbf16, #tpu.memory_space<vmem>>, vector<1x128x128xbf16>
      %29 = vector.shape_cast %28 : vector<1x128x128xbf16> to vector<128x128xbf16>
      %30 = arith.extf %29 : vector<128x128xbf16> to vector<128x128xf32>
      %31 = vector.broadcast %27 : vector<1x128xf32> to vector<128x128xf32>
      %32 = arith.mulf %31, %30 : vector<128x128xf32>
      %33 = arith.addf %25, %32 : vector<128x128xf32>
      %c0_18 = arith.constant 0 : index
      %c0_19 = arith.constant 0 : index
      %c0_20 = arith.constant 0 : index
      %34 = vector.load %arg6[%c0_18, %c0_19, %c0_20] : memref<1x128x128xi8, #tpu.memory_space<vmem>>, vector<1x128x128xi8>
      %35 = vector.shape_cast %34 : vector<1x128x128xi8> to vector<128x128xi8>
      %36 = arith.sitofp %35 : vector<128x128xi8> to vector<128x128xf32>
      %37 = arith.truncf %36 : vector<128x128xf32> to vector<128x128xbf16>
      %38 = arith.truncf %33 : vector<128x128xf32> to vector<128x128xbf16>
      %cst = arith.constant dense<0.000000e+00> : vector<128x128xf32>
      %39 = tpu.matmul %37, %38, %cst {dimension_numbers = #tpu.dot_dimension_numbers<[1], [0], [0], [1], [0, 0, 1, 1], [], []>} : vector<128x128xbf16>, vector<128x128xbf16>, vector<128x128xf32> -> vector<128x128xf32>
      %c0_21 = arith.constant 0 : index
      %c0_22 = arith.constant 0 : index
      %40 = vector.load %arg11[%c0_21, %c0_22] : memref<128x128xf32, #tpu.memory_space<vmem>>, vector<128x128xf32>
      %c0_23 = arith.constant 0 : index
      %c0_24 = arith.constant 0 : index
      %c0_25 = arith.constant 0 : index
      %41 = vector.load %arg8[%c0_23, %c0_24, %c0_25] : memref<1x128x1xf32, #tpu.memory_space<vmem>>, vector<1x128x1xf32>
      %42 = vector.shape_cast %41 : vector<1x128x1xf32> to vector<128x1xf32>
      %43 = vector.broadcast %42 : vector<128x1xf32> to vector<128x128xf32>
      %44 = arith.mulf %43, %39 : vector<128x128xf32>
      %45 = arith.addf %40, %44 : vector<128x128xf32>
      %c0_26 = arith.constant 0 : index
      %c0_27 = arith.constant 0 : index
      %46 = vector.load %arg11[%c0_26, %c0_27] : memref<128x128xf32, #tpu.memory_space<vmem>>, vector<128x128xf32>
      tpu.vector_store %arg11[%c0_26, %c0_27], %45 {strides = array<i32>} : memref<128x128xf32, #tpu.memory_space<vmem>>, vector<128x128xf32>,
    } else {
    }
    %c0_i32_4 = arith.constant 0 : i32
    %14 = arith.cmpi eq, %arg1, %c0_i32_4 : i32
    %c2_i32 = arith.constant 2 : i32
    %15 = arith.cmpi eq, %arg2, %c2_i32 : i32
    %16 = arith.andi %14, %15 : i1
    %17 = arith.extui %16 : i1 to i32
    %c0_i32_5 = arith.constant 0 : i32
    %18 = arith.cmpi ne, %17, %c0_i32_5 : i32
    scf.if %18 {
      %c0 = arith.constant 0 : index
      %c0_6 = arith.constant 0 : index
      %19 = vector.load %arg11[%c0, %c0_6] : memref<128x128xf32, #tpu.memory_space<vmem>>, vector<128x128xf32>
      %cst = arith.constant 0.000000e+00 : f32
      %20 = vector.broadcast %cst : f32 to vector<128x128xf32>
      %21 = arith.maximumf %19, %20 : vector<128x128xf32>
      %c0_7 = arith.constant 0 : index
      %c0_8 = arith.constant 0 : index
      %22 = vector.load %arg10[%c0_7, %c0_8] : memref<128x128xf32, #tpu.memory_space<vmem>>, vector<128x128xf32>
      tpu.vector_store %arg10[%c0_7, %c0_8], %21 {strides = array<i32>} : memref<128x128xf32, #tpu.memory_space<vmem>>, vector<128x128xf32>,
    } else {
    }
    return
  }
  func.func @transform_0(%arg0: i32, %arg1: i32, %arg2: i32, %arg3: memref<3xi32, #tpu.memory_space<smem>>, %arg4: memref<3x3xi32, #tpu.memory_space<smem>>) -> (i32, i32, i32, i32) {
    %c0_i32 = arith.constant 0 : i32
    %c0_i32_0 = arith.constant 0 : i32
    %c0_i32_1 = arith.constant 0 : i32
    %c0_i32_2 = arith.constant 0 : i32
    return %arg2, %c0_i32, %c0_i32_0, %c0_i32_1 : i32, i32, i32, i32
  }
  func.func @transform_1(%arg0: i32, %arg1: i32, %arg2: i32, %arg3: memref<3xi32, #tpu.memory_space<smem>>, %arg4: memref<3x3xi32, #tpu.memory_space<smem>>) -> (i32, i32, i32) {
    %c1_i32 = arith.constant 1 : i32
    %0 = arith.muli %arg0, %c1_i32 : i32
    %1 = arith.addi %0, %arg1 : i32
    %c3_i32 = arith.constant 3 : i32
    %2 = arith.muli %1, %c3_i32 : i32
    %3 = arith.addi %2, %arg2 : i32
    %c0 = arith.constant 0 : index
    %4 = arith.index_cast %3 : i32 to index
    %5 = memref.load %arg4[%c0, %4] : memref<3x3xi32, #tpu.memory_space<smem>>
    %c1 = arith.constant 1 : index
    %6 = arith.index_cast %3 : i32 to index
    %7 = memref.load %arg4[%c1, %6] : memref<3x3xi32, #tpu.memory_space<smem>>
    %c2 = arith.constant 2 : index
    %8 = arith.index_cast %3 : i32 to index
    %9 = memref.load %arg4[%c2, %8] : memref<3x3xi32, #tpu.memory_space<smem>>
    %c0_i32 = arith.constant 0 : i32
    return %5, %7, %9 : i32, i32, i32
  }
  func.func @transform_2(%arg0: i32, %arg1: i32, %arg2: i32, %arg3: memref<3xi32, #tpu.memory_space<smem>>, %arg4: memref<3x3xi32, #tpu.memory_space<smem>>) -> (i32, i32, i32) {
    %c0_i32 = arith.constant 0 : i32
    %c0_i32_0 = arith.constant 0 : i32
    %c0_i32_1 = arith.constant 0 : i32
    return %c0_i32, %arg1, %c0_i32_0 : i32, i32, i32
  }
  func.func @transform_3(%arg0: i32, %arg1: i32, %arg2: i32, %arg3: memref<3xi32, #tpu.memory_space<smem>>, %arg4: memref<3x3xi32, #tpu.memory_space<smem>>) -> (i32, i32, i32) {
    %c0_i32 = arith.constant 0 : i32
    %c0_i32_0 = arith.constant 0 : i32
    return %arg2, %arg0, %c0_i32 : i32, i32, i32
  }
  func.func @transform_4(%arg0: i32, %arg1: i32, %arg2: i32, %arg3: memref<3xi32, #tpu.memory_space<smem>>, %arg4: memref<3x3xi32, #tpu.memory_space<smem>>) -> (i32, i32) {
    %c0_i32 = arith.constant 0 : i32
    %c0_i32_0 = arith.constant 0 : i32
    return %arg0, %c0_i32 : i32, i32
  }
  func.func @transform_5(%arg0: i32, %arg1: i32, %arg2: i32, %arg3: memref<3xi32, #tpu.memory_space<smem>>, %arg4: memref<3x3xi32, #tpu.memory_space<smem>>) -> (i32, i32) {
    %c0_i32 = arith.constant 0 : i32
    %c0_i32_0 = arith.constant 0 : i32
    return %arg0, %c0_i32 : i32, i32
  }
}

</mosaic_0001>

<llo_original>
// kernel: tpu_custom_call.1
$region0: #{tpu_custom_call.1}
  #allocation0 [shape = 'u32[]', space=smem, size = 0x4, offset = 0x4, fixed_abs, tag = 'smem constant byte address 0x4 - core index']
  #allocation1 [shape = 'u32[144,128]{1,0:T(1,128)}', space=vmem, size = 0x12000, scoped, tag = 'internal scratch']
  #allocation2 [shape = 'f32[128,128]{1,0:T(8,128)}', space=vmem, size = 0x10000, scoped, tag = 'scratch operand']
  #allocation3 [shape = 's32[1]{0}', space=sflag, size = 0x4, scoped, tag = 'scoped memory for tpu_custom_call.1']
  #allocation4 [shape = 'u8[512]{0}', space=smem, size = 0x200, scoped, tag = 'prefetched SMEM operand 0']
  #allocation5 [shape = 'u8[2048]{0}', space=smem, size = 0x800, scoped, tag = 'prefetched SMEM operand 1']
  %s0 = inlined_call_operand.vmem [shape: s32[3], index: 0, kind: input, shape index: {}]
  %s1 = inlined_call_operand.vmem [shape: s32[3,3], index: 1, kind: input, shape index: {}]
  %s2 = inlined_call_operand.vmem [shape: f32[3,2,1,128], index: 2, kind: input, shape index: {}]
  %s3 = inlined_call_operand.vmem [shape: s8[3,128,128], index: 3, kind: input, shape index: {}]
  %s4 = inlined_call_operand.vmem [shape: bf16[2,128,128], index: 4, kind: input, shape index: {}]
  %s5 = inlined_call_operand.vmem [shape: f32[3,128,1], index: 5, kind: input, shape index: {}]
  %s6 = inlined_call_operand.vmem [shape: f32[128,128], index: 6, kind: input, shape index: {}]
  %s7 = inlined_call_operand.hbm [shape: f32[128,128], index: 7, kind: output, shape index: {}]
  %s8 = sld [smem:[#allocation0]]
  $region65: #{tpu_custom_call.1} parent=0
    _
  %s10 = ssub.s32 1, %s8
  %s11 = scalar_select 0, %s10, %s8
  %s12 = sshll.u32 %s0, 4
  %s13 = int_to_ptr.vmem [resolvable:$true] %s12
  %15 = dma.vmem_to_smem %s13, 16, [#allocation4], [#allocation3]
  %s16 = sshll.u32 %s1, 4
  %s17 = int_to_ptr.vmem [resolvable:$true] %s16
  %19 = dma.vmem_to_smem %s17, 64, [#allocation5], [#allocation3]
  %20 = dma.done [#allocation3], 80
  %21 = sfence
  $region1: #{tpu_custom_call.1} parent=0
    #allocation6 [shape = 'u8[65536]{0}', space=vmem, size = 0x10000, scoped, tag = 'output window, operand 0, single buffered']
    #allocation7 [shape = 's32[2]{0}', space=sflag, size = 0x8, scoped, tag = 'scoped memory for tpu_custom_call.1']
    %22 = vsyncpa [#allocation7], 0
    loop: start=0, step=1, limit=5
    $region2: #{tpu_custom_call.1} parent=1 // loop_pre_header
      _
    $region3: #{tpu_custom_call.1} parent=1 // loop_header
      %s24 = sphi 0, %s28
      %p25 = scmp.ge.s32.totalorder %s24, 5
      %s31 = sphi 0, %s50
      %s32 = sphi 0, %s46
      %s33 = sphi 0, %s42
      %s34 = sphi 0, %s31
      %s35 = sphi 0, %s32
      %s36 = sphi 0, %s33
      %s37 = sphi 0, %s34
      %s38 = sphi 0, %s35
      %s39 = sphi 0, %s36
      %s53 = sphi 0, %s55
      %s56 = sphi 0, %s53
      %s57 = sphi 0, %s56
      %s73 = sphi 0, %s57
      %s115 = sphi 0, %s117
      %s118 = sphi 0, %s115
      %s119 = sphi 0, %s118
      %s135 = sphi 0, %s119
      %s141 = sphi 0, %s143
      %s144 = sphi 0, %s141
      %s145 = sphi 0, %s144
      %s161 = sphi 0, %s145
      %s169 = sphi 0, %s171
      %s172 = sphi 0, %s169
      %s173 = sphi 0, %s172
      %s189 = sphi 0, %s173
      %s195 = sphi 0, %s197
      %s198 = sphi 0, %s195
      %s199 = sphi 0, %s198
      %s215 = sphi 0, %s199
      %s221 = sphi 0, %s223
      %s224 = sphi 0, %s221
      %s225 = sphi 0, %s224
      %s241 = sphi 0, %s225
    $region4: #{tpu_custom_call.1} parent=1 // loop_header_branch
      %27 = sbr.rel (%p25) target = $region8
    $region5: #{tpu_custom_call.1} parent=1 // loop_body
      %s29 = ssub.s32 %s24, 1
      %s30 = ssub.s32 %s24, 2
      %s40 = sadd.s32 1, %s33
      %p41 = scmp.ge.s32.totalorder %s40, 3
      %s42 = scalar_select %p41, 0, %s40
      %s43 = sadd.s32 1, %s32
      %s44 = scalar_select %p41, %s43, %s32
      %p45 = scmp.ge.s32.totalorder %s44, 1
      %s46 = scalar_select %p45, 0, %s44
      %s47 = sadd.s32 1, %s31
      %s48 = scalar_select %p45, %s47, %s31
      %p49 = scmp.ge.s32.totalorder %s48, 1
      %s50 = scalar_select %p49, 0, %s48
      %s51 = ssub.s32 %s33, %s42
      %p52 = scmp.eq.s32.totalorder %s51, 0
      %s54 = sadd.s32 %s53, 1
      %s55 = scalar_select %p52, %s53, %s54
      %p58 = pneg %p52
      %p59 = scmp.eq.s32.totalorder %s24, 2
      %p60 = por %p58, %p59
      %p61 = scmp.ne.s32.totalorder %s53, %s56
      %p62 = scmp.eq.s32.totalorder %s24, 0
      %p63 = por %p61, %p62
      %p64 = scmp.ne.s32.totalorder %s53, %s56
      %p65 = scmp.eq.s32.totalorder %s29, 2
      %p66 = por %p64, %p65
      %p67 = scmp.ne.s32.totalorder %s56, %s57
      %p68 = scmp.eq.s32.totalorder %s29, 0
      %p69 = por %p67, %p68
      %p70 = scmp.ne.s32.totalorder %s56, %s57
      %p71 = scmp.eq.s32.totalorder %s30, 2
      %p72 = por %p70, %p71
      %p74 = scmp.ne.s32.totalorder %s57, %s73
      %p75 = scmp.eq.s32.totalorder %s30, 0
      %p76 = por %p74, %p75
      %s77 = sadd.s32 %s31, %s32
      %s78 = smul.u32 %s77, 3
      %s79 = sadd.s32 %s78, %s33
      %s80 = sld [smem:[#allocation5 + %s79]]
      %s81 = sshra.s32 %s79, 7
      %s82 = sand.u32 %s79, 127
      %s83 = sadd.s32 %s81, 1
      %s84 = smul.u32 %s83, 128
      %s85 = sshra.s32 %s79, 7
      %s86 = sand.u32 %s79, 127
      %s87 = sadd.s32 %s84, %s86
      %s88 = sld [smem:[#allocation5 + %s87]]
      %s89 = sadd.s32 %s81, 2
      %s90 = smul.u32 %s89, 128
      %s91 = sadd.s32 %s90, %s86
      %s92 = sld [smem:[#allocation5 + %s91]]
      %s93 = sadd.s32 %s50, %s46
      %s94 = smul.u32 %s93, 3
      %s95 = sadd.s32 %s94, %s42
      %s96 = sld [smem:[#allocation5 + %s95]]
      %s97 = sshra.s32 %s95, 7
      %s98 = sand.u32 %s95, 127
      %s99 = sadd.s32 %s97, 1
      %s100 = smul.u32 %s99, 128
      %s101 = sshra.s32 %s95, 7
      %s102 = sand.u32 %s95, 127
      %s103 = sadd.s32 %s100, %s102
      %s104 = sld [smem:[#allocation5 + %s103]]
      %s105 = sadd.s32 %s97, 2
      %s106 = smul.u32 %s105, 128
      %s107 = sadd.s32 %s106, %s102
      %s108 = sld [smem:[#allocation5 + %s107]]
      %s109 = ssub.s32 %s80, %s96
      %s110 = ssub.s32 %s88, %s104
      %s111 = sor.u32 %s109, %s110
      %s112 = ssub.s32 %s92, %s108
      %s113 = sor.u32 %s111, %s112
      %p114 = scmp.eq.s32.totalorder %s113, 0
      %s116 = sadd.s32 %s115, 1
      %s117 = scalar_select %p114, %s115, %s116
      %p120 = pneg %p114
      %p121 = scmp.eq.s32.totalorder %s24, 2
      %p122 = por %p120, %p121
      %p123 = scmp.ne.s32.totalorder %s115, %s118
      %p124 = scmp.eq.s32.totalorder %s24, 0
      %p125 = por %p123, %p124
      %p126 = scmp.ne.s32.totalorder %s115, %s118
      %p127 = scmp.eq.s32.totalorder %s29, 2
      %p128 = por %p126, %p127
      %p129 = scmp.ne.s32.totalorder %s118, %s119
      %p130 = scmp.eq.s32.totalorder %s29, 0
      %p131 = por %p129, %p130
      %p132 = scmp.ne.s32.totalorder %s118, %s119
      %p133 = scmp.eq.s32.totalorder %s30, 2
      %p134 = por %p132, %p133
      %p136 = scmp.ne.s32.totalorder %s119, %s135
      %p137 = scmp.eq.s32.totalorder %s30, 0
      %p138 = por %p136, %p137
      %s139 = ssub.s32 %s32, %s46
      %p140 = scmp.eq.s32.totalorder %s139, 0
      %s142 = sadd.s32 %s141, 1
      %s143 = scalar_select %p140, %s141, %s142
      %p146 = pneg %p140
      %p147 = scmp.eq.s32.totalorder %s24, 2
      %p148 = por %p146, %p147
      %p149 = scmp.ne.s32.totalorder %s141, %s144
      %p150 = scmp.eq.s32.totalorder %s24, 0
      %p151 = por %p149, %p150
      %p152 = scmp.ne.s32.totalorder %s141, %s144
      %p153 = scmp.eq.s32.totalorder %s29, 2
      %p154 = por %p152, %p153
      %p155 = scmp.ne.s32.totalorder %s144, %s145
      %p156 = scmp.eq.s32.totalorder %s29, 0
      %p157 = por %p155, %p156
      %p158 = scmp.ne.s32.totalorder %s144, %s145
      %p159 = scmp.eq.s32.totalorder %s30, 2
      %p160 = por %p158, %p159
      %p162 = scmp.ne.s32.totalorder %s145, %s161
      %p163 = scmp.eq.s32.totalorder %s30, 0
      %p164 = por %p162, %p163
      %s165 = ssub.s32 %s33, %s42
      %s166 = ssub.s32 %s31, %s50
      %s167 = sor.u32 %s165, %s166
      %p168 = scmp.eq.s32.totalorder %s167, 0
      %s170 = sadd.s32 %s169, 1
      %s171 = scalar_select %p168, %s169, %s170
      %p174 = pneg %p168
      %p175 = scmp.eq.s32.totalorder %s24, 2
      %p176 = por %p174, %p175
      %p177 = scmp.ne.s32.totalorder %s169, %s172
      %p178 = scmp.eq.s32.totalorder %s24, 0
      %p179 = por %p177, %p178
      %p180 = scmp.ne.s32.totalorder %s169, %s172
      %p181 = scmp.eq.s32.totalorder %s29, 2
      %p182 = por %p180, %p181
      %p183 = scmp.ne.s32.totalorder %s172, %s173
      %p184 = scmp.eq.s32.totalorder %s29, 0
      %p185 = por %p183, %p184
      %p186 = scmp.ne.s32.totalorder %s172, %s173
      %p187 = scmp.eq.s32.totalorder %s30, 2
      %p188 = por %p186, %p187
      %p190 = scmp.ne.s32.totalorder %s173, %s189
      %p191 = scmp.eq.s32.totalorder %s30, 0
      %p192 = por %p190, %p191
      %s193 = ssub.s32 %s31, %s50
      %p194 = scmp.eq.s32.totalorder %s193, 0
      %s196 = sadd.s32 %s195, 1
      %s197 = scalar_select %p194, %s195, %s196
      %p200 = pneg %p194
      %p201 = scmp.eq.s32.totalorder %s24, 2
      %p202 = por %p200, %p201
      %p203 = scmp.ne.s32.totalorder %s195, %s198
      %p204 = scmp.eq.s32.totalorder %s24, 0
      %p205 = por %p203, %p204
      %p206 = scmp.ne.s32.totalorder %s195, %s198
      %p207 = scmp.eq.s32.totalorder %s29, 2
      %p208 = por %p206, %p207
      %p209 = scmp.ne.s32.totalorder %s198, %s199
      %p210 = scmp.eq.s32.totalorder %s29, 0
      %p211 = por %p209, %p210
      %p212 = scmp.ne.s32.totalorder %s198, %s199
      %p213 = scmp.eq.s32.totalorder %s30, 2
      %p214 = por %p212, %p213
      %p216 = scmp.ne.s32.totalorder %s199, %s215
      %p217 = scmp.eq.s32.totalorder %s30, 0
      %p218 = por %p216, %p217
      %s219 = ssub.s32 %s31, %s50
      %p220 = scmp.eq.s32.totalorder %s219, 0
      %s222 = sadd.s32 %s221, 1
      %s223 = scalar_select %p220, %s221, %s222
      %p226 = pneg %p220
      %p227 = scmp.eq.s32.totalorder %s24, 2
      %p228 = por %p226, %p227
      %p229 = scmp.ne.s32.totalorder %s221, %s224
      %p230 = scmp.eq.s32.totalorder %s24, 0
      %p231 = por %p229, %p230
      %p232 = scmp.ne.s32.totalorder %s221, %s224
      %p233 = scmp.eq.s32.totalorder %s29, 2
      %p234 = por %p232, %p233
      %p235 = scmp.ne.s32.totalorder %s224, %s225
      %p236 = scmp.eq.s32.totalorder %s29, 0
      %p237 = por %p235, %p236
      %p238 = scmp.ne.s32.totalorder %s224, %s225
      %p239 = scmp.eq.s32.totalorder %s30, 2
      %p240 = por %p238, %p239
      %p242 = scmp.ne.s32.totalorder %s225, %s241
      %p243 = scmp.eq.s32.totalorder %s30, 0
      %p244 = por %p242, %p243
      %p245 = scmp.le.s32.totalorder 1, %s24
      %p246 = scmp.lt.s32.totalorder %s24, 4
      %p247 = pnand %p245, %p246
      %p248 = pneg %p247
      // Predicated region
      $region9: #{tpu_custom_call.1} parent=5 // pred_check
        _
      $region10: #{tpu_custom_call.1} parent=5 // pred_check_branch
        %250 = sbr.rel (%p247) target = $region12
      $region11: #{tpu_custom_call.1} parent=5 // pred_region
        %s251 = ssub.s32 %s24, 1
        // Predicated region
        $region13: #{tpu_custom_call.1} parent=11 // pred_check
          %p252 = pneg %p157
        $region14: #{tpu_custom_call.1} parent=11 // pred_check_branch
          %254 = sbr.rel (%p252) target = $region16
        $region15: #{tpu_custom_call.1} parent=11 // pred_region
          %s255 = smul.u32 16, %s35
          %p256 = scmp.lt.s32.totalorder %s255, 15
          %s257 = scalar_select %p256, %s255, 15
          %s258 = smul.addr %s257, 4
          %s259 = scalar_lea.vmem %s4, %s258
          %s260 = smul.u32 16, %s35
        $region16: #{tpu_custom_call.1} parent=11 // pred_fallthru
          _
        // Predicated region
        $region17: #{tpu_custom_call.1} parent=11 // pred_check
          %p261 = pneg %p211
        $region18: #{tpu_custom_call.1} parent=11 // pred_check_branch
          %263 = sbr.rel (%p261) target = $region20
        $region19: #{tpu_custom_call.1} parent=11 // pred_region
          %s264 = smul.u32 16, %s34
          %p265 = scmp.lt.s32.totalorder %s264, 15
          %s266 = scalar_select %p265, %s264, 15
          %s267 = smul.addr %s266, 8
          %s268 = scalar_lea.vmem %s6, %s267
          %s269 = smul.u32 16, %s34
        $region20: #{tpu_custom_call.1} parent=11 // pred_fallthru
          _
      $region12: #{tpu_custom_call.1} parent=5 // pred_fallthru
        _
      %p270 = scmp.lt.s32.totalorder %s24, 3
      // Predicated region
      $region21: #{tpu_custom_call.1} parent=5 // pred_check
        %p271 = pneg %p270
      $region22: #{tpu_custom_call.1} parent=5 // pred_check_branch
        %273 = sbr.rel (%p271) target = $region24
      $region23: #{tpu_custom_call.1} parent=5 // pred_region
        // Predicated region
        $region25: #{tpu_custom_call.1} parent=23 // pred_check
          %p274 = pneg %p63
        $region26: #{tpu_custom_call.1} parent=23 // pred_check_branch
          %276 = sbr.rel (%p274) target = $region28
        $region27: #{tpu_custom_call.1} parent=23 // pred_region
          %p277 = scmp.lt.s32.totalorder %s33, 2
          %s278 = scalar_select %p277, %s33, 2
          %s279 = smul.addr %s278, 2
          %s280 = scalar_lea.vmem %s2, %s279
        $region28: #{tpu_custom_call.1} parent=23 // pred_fallthru
          _
        // Predicated region
        $region29: #{tpu_custom_call.1} parent=23 // pred_check
          %p281 = pneg %p125
        $region30: #{tpu_custom_call.1} parent=23 // pred_check_branch
          %283 = sbr.rel (%p281) target = $region32
        $region31: #{tpu_custom_call.1} parent=23 // pred_region
          %s284 = sadd.s32 %s31, %s32
          %s285 = smul.u32 %s284, 3
          %s286 = sadd.s32 %s285, %s33
          %s287 = sld [smem:[#allocation5 + %s286]]
          %s288 = sshra.s32 %s286, 7
          %s289 = sand.u32 %s286, 127
          %s290 = sadd.s32 %s288, 1
          %s291 = smul.u32 %s290, 128
          %s292 = sshra.s32 %s286, 7
          %s293 = sand.u32 %s286, 127
          %s294 = sadd.s32 %s291, %s293
          %s295 = sld [smem:[#allocation5 + %s294]]
          %s296 = sadd.s32 %s288, 2
          %s297 = smul.u32 %s296, 128
          %s298 = sadd.s32 %s297, %s293
          %s299 = sld [smem:[#allocation5 + %s298]]
          %s300 = smul.u32 4, %s295
          %p301 = scmp.lt.s32.totalorder %s287, 2
          %s302 = scalar_select %p301, %s287, 2
          %p303 = scmp.lt.s32.totalorder %s300, 3
          %s304 = scalar_select %p303, %s300, 3
          %p305 = scmp.lt.s32.totalorder %s299, 0
          %s306 = scalar_select %p305, %s299, 0
          %s307 = sadd.s32 %s306, %s304
          %s308 = smul.addr %s302, 4
          %s309 = sadd.s32 %s307, %s308
          %s310 = smul.addr %s309, 8
          %s311 = scalar_lea.vmem %s3, %s310
          %s312 = sadd.s32 %s31, %s32
          %s313 = smul.u32 %s312, 3
          %s314 = sadd.s32 %s313, %s33
          %s315 = sld [smem:[#allocation5 + %s314]]
          %s316 = sshra.s32 %s314, 7
          %s317 = sand.u32 %s314, 127
          %s318 = sadd.s32 %s316, 1
          %s319 = smul.u32 %s318, 128
          %s320 = sshra.s32 %s314, 7
          %s321 = sand.u32 %s314, 127
          %s322 = sadd.s32 %s319, %s321
          %s323 = sld [smem:[#allocation5 + %s322]]
          %s324 = sadd.s32 %s316, 2
          %s325 = smul.u32 %s324, 128
          %s326 = sadd.s32 %s325, %s321
          %s327 = sld [smem:[#allocation5 + %s326]]
          %s328 = smul.u32 4, %s323
        $region32: #{tpu_custom_call.1} parent=23 // pred_fallthru
          _
        // Predicated region
        $region33: #{tpu_custom_call.1} parent=23 // pred_check
          %p329 = pneg %p179
        $region34: #{tpu_custom_call.1} parent=23 // pred_check_branch
          %331 = sbr.rel (%p329) target = $region36
        $region35: #{tpu_custom_call.1} parent=23 // pred_region
          %s332 = smul.u32 16, %s31
          %p333 = scmp.lt.s32.totalorder %s33, 2
          %s334 = scalar_select %p333, %s33, 2
          %p335 = scmp.lt.s32.totalorder %s332, 15
          %s336 = scalar_select %p335, %s332, 15
          %s337 = smul.addr %s334, 16
          %s338 = sadd.s32 %s336, %s337
          %s339 = smul.addr %s338, 8
          %s340 = scalar_lea.vmem %s5, %s339
          %s341 = smul.u32 16, %s31
        $region36: #{tpu_custom_call.1} parent=23 // pred_fallthru
          _
      $region24: #{tpu_custom_call.1} parent=5 // pred_fallthru
        _
      %p342 = scmp.le.s32.totalorder 1, %s24
      %p343 = scmp.lt.s32.totalorder %s24, 4
      %p344 = pnand %p342, %p343
      %p345 = pneg %p344
      // Predicated region
      $region37: #{tpu_custom_call.1} parent=5 // pred_check
        _
      $region38: #{tpu_custom_call.1} parent=5 // pred_check_branch
        %347 = sbr.rel (%p344) target = $region40
      $region39: #{tpu_custom_call.1} parent=5 // pred_region
        %s348 = ssub.s32 %s24, 1
        %p349 = scmp.lt.s32.totalorder %s36, 2
        %s350 = scalar_select %p349, %s36, 2
        %s351 = smul.addr %s350, 2
        %s352 = scalar_lea.vmem %s2, %s351
        %p353 = pneg %p69
        %p354 = pneg %p66
        %s355 = sadd.s32 %s34, %s35
        %s356 = smul.u32 %s355, 3
        %s357 = sadd.s32 %s356, %s36
        %s358 = sld [smem:[#allocation5 + %s357]]
        %s359 = sshra.s32 %s357, 7
        %s360 = sand.u32 %s357, 127
        %s361 = sadd.s32 %s359, 1
        %s362 = smul.u32 %s361, 128
        %s363 = sshra.s32 %s357, 7
        %s364 = sand.u32 %s357, 127
        %s365 = sadd.s32 %s362, %s364
        %s366 = sld [smem:[#allocation5 + %s365]]
        %s367 = sadd.s32 %s359, 2
        %s368 = smul.u32 %s367, 128
        %s369 = sadd.s32 %s368, %s364
        %s370 = sld [smem:[#allocation5 + %s369]]
        %s371 = smul.u32 4, %s366
        %p372 = scmp.lt.s32.totalorder %s358, 2
        %s373 = scalar_select %p372, %s358, 2
        %p374 = scmp.lt.s32.totalorder %s371, 3
        %s375 = scalar_select %p374, %s371, 3
        %p376 = scmp.lt.s32.totalorder %s370, 0
        %s377 = scalar_select %p376, %s370, 0
        %s378 = sadd.s32 %s377, %s375
        %s379 = smul.addr %s373, 4
        %s380 = sadd.s32 %s378, %s379
        %s381 = smul.addr %s380, 8
        %s382 = scalar_lea.vmem %s3, %s381
        %p383 = pneg %p131
        %p384 = pneg %p128
        %s385 = smul.u32 16, %s35
        %p386 = scmp.lt.s32.totalorder %s385, 15
        %s387 = scalar_select %p386, %s385, 15
        %s388 = smul.addr %s387, 4
        %s389 = scalar_lea.vmem %s4, %s388
        %p390 = pneg %p157
        %p391 = pneg %p154
        %s392 = smul.u32 16, %s34
        %p393 = scmp.lt.s32.totalorder %s36, 2
        %s394 = scalar_select %p393, %s36, 2
        %p395 = scmp.lt.s32.totalorder %s392, 15
        %s396 = scalar_select %p395, %s392, 15
        %s397 = smul.addr %s394, 16
        %s398 = sadd.s32 %s396, %s397
        %s399 = smul.addr %s398, 8
        %s400 = scalar_lea.vmem %s5, %s399
        %p401 = pneg %p185
        %p402 = pneg %p182
        %s403 = smul.u32 16, %s34
        %p404 = scmp.lt.s32.totalorder %s403, 15
        %s405 = scalar_select %p404, %s403, 15
        %s406 = smul.addr %s405, 8
        %s407 = scalar_lea.vmem %s6, %s406
        %p408 = pneg %p211
        %p409 = pneg %p208
        %p410 = pneg %p237
        %p411 = pneg %p234
        %p412 = scmp.lt.s32.totalorder %s36, 2
        %s413 = scalar_select %p412, %s36, 2
        %s414 = smul.addr %s413, 2
        %s415 = scalar_lea.vmem %s2, %s414
        %s416 = sadd.s32 %s34, %s35
        %s417 = smul.u32 %s416, 3
        %s418 = sadd.s32 %s417, %s36
        %s419 = sld [smem:[#allocation5 + %s418]]
        %s420 = sshra.s32 %s418, 7
        %s421 = sand.u32 %s418, 127
        %s422 = sadd.s32 %s420, 1
        %s423 = smul.u32 %s422, 128
        %s424 = sshra.s32 %s418, 7
        %s425 = sand.u32 %s418, 127
        %s426 = sadd.s32 %s423, %s425
        %s427 = sld [smem:[#allocation5 + %s426]]
        %s428 = sadd.s32 %s420, 2
        %s429 = smul.u32 %s428, 128
        %s430 = sadd.s32 %s429, %s425
        %s431 = sld [smem:[#allocation5 + %s430]]
        %s432 = smul.u32 4, %s427
        %p433 = scmp.lt.s32.totalorder %s419, 2
        %s434 = scalar_select %p433, %s419, 2
        %p435 = scmp.lt.s32.totalorder %s432, 3
        %s436 = scalar_select %p435, %s432, 3
        %p437 = scmp.lt.s32.totalorder %s431, 0
        %s438 = scalar_select %p437, %s431, 0
        %s439 = sadd.s32 %s438, %s436
        %s440 = smul.addr %s434, 4
        %s441 = sadd.s32 %s439, %s440
        %s442 = smul.addr %s441, 8
        %s443 = scalar_lea.vmem %s3, %s442
        %s444 = sadd.s32 %s34, %s35
        %s445 = smul.u32 %s444, 3
        %s446 = sadd.s32 %s445, %s36
        %s447 = sld [smem:[#allocation5 + %s446]]
        %s448 = sshra.s32 %s446, 7
        %s449 = sand.u32 %s446, 127
        %s450 = sadd.s32 %s448, 1
        %s451 = smul.u32 %s450, 128
        %s452 = sshra.s32 %s446, 7
        %s453 = sand.u32 %s446, 127
        %s454 = sadd.s32 %s451, %s453
        %s455 = sld [smem:[#allocation5 + %s454]]
        %s456 = sadd.s32 %s448, 2
        %s457 = smul.u32 %s456, 128
        %s458 = sadd.s32 %s457, %s453
        %s459 = sld [smem:[#allocation5 + %s458]]
        %s460 = smul.u32 4, %s455
        %s461 = smul.u32 16, %s35
        %p462 = scmp.lt.s32.totalorder %s461, 15
        %s463 = scalar_select %p462, %s461, 15
        %s464 = smul.addr %s463, 4
        %s465 = scalar_lea.vmem %s4, %s464
        %s466 = smul.u32 16, %s35
        %s467 = smul.u32 16, %s34
        %p468 = scmp.lt.s32.totalorder %s36, 2
        %s469 = scalar_select %p468, %s36, 2
        %p470 = scmp.lt.s32.totalorder %s467, 15
        %s471 = scalar_select %p470, %s467, 15
        %s472 = smul.addr %s469, 16
        %s473 = sadd.s32 %s471, %s472
        %s474 = smul.addr %s473, 8
        %s475 = scalar_lea.vmem %s5, %s474
        %s476 = smul.u32 16, %s34
        %s477 = smul.u32 16, %s34
        %p478 = scmp.lt.s32.totalorder %s477, 15
        %s479 = scalar_select %p478, %s477, 15
        %s480 = smul.addr %s479, 8
        %s481 = scalar_lea.vmem %s6, %s480
        %s482 = smul.u32 16, %s34
        %s483 = smul.u32 16, %s34
        %p485 = scmp.eq.s32.totalorder %s35, 0
        %p486 = scmp.eq.s32.totalorder %s36, 0
        %p487 = pnand %p485, %p486
        %p488 = pneg %p487
        // Predicated region
        $region41: #{tpu_custom_call.1} parent=39 // pred_check
          _
        $region42: #{tpu_custom_call.1} parent=39 // pred_check_branch
          %490 = sbr.rel (%p487) target = $region44
        $region43: #{tpu_custom_call.1} parent=39 // pred_region
          %v491 = vld [vmem:[%s481] sm:$0xff]
          %v492 = vld [vmem:[%s481 + $0x8] sm:$0xff]
          %v493 = vld [vmem:[%s481 + $0x10] sm:$0xff]
          %v494 = vld [vmem:[%s481 + $0x18] sm:$0xff]
          %v495 = vld [vmem:[%s481 + $0x20] sm:$0xff]
          %v496 = vld [vmem:[%s481 + $0x28] sm:$0xff]
          %v497 = vld [vmem:[%s481 + $0x30] sm:$0xff]
          %v498 = vld [vmem:[%s481 + $0x38] sm:$0xff]
          %v499 = vld [vmem:[%s481 + $0x40] sm:$0xff]
          %v500 = vld [vmem:[%s481 + $0x48] sm:$0xff]
          %v501 = vld [vmem:[%s481 + $0x50] sm:$0xff]
          %v502 = vld [vmem:[%s481 + $0x58] sm:$0xff]
          %v503 = vld [vmem:[%s481 + $0x60] sm:$0xff]
          %v504 = vld [vmem:[%s481 + $0x68] sm:$0xff]
          %v505 = vld [vmem:[%s481 + $0x70] sm:$0xff]
          %v506 = vld [vmem:[%s481 + $0x78] sm:$0xff]
          %507 = vst [vmem:[#allocation2] sm:$0xff] %v491
          %508 = vst [vmem:[#allocation2 + $0x8] sm:$0xff] %v492
          %509 = vst [vmem:[#allocation2 + $0x10] sm:$0xff] %v493
          %510 = vst [vmem:[#allocation2 + $0x18] sm:$0xff] %v494
          %511 = vst [vmem:[#allocation2 + $0x20] sm:$0xff] %v495
          %512 = vst [vmem:[#allocation2 + $0x28] sm:$0xff] %v496
          %513 = vst [vmem:[#allocation2 + $0x30] sm:$0xff] %v497
          %514 = vst [vmem:[#allocation2 + $0x38] sm:$0xff] %v498
          %515 = vst [vmem:[#allocation2 + $0x40] sm:$0xff] %v499
          %516 = vst [vmem:[#allocation2 + $0x48] sm:$0xff] %v500
          %517 = vst [vmem:[#allocation2 + $0x50] sm:$0xff] %v501
          %518 = vst [vmem:[#allocation2 + $0x58] sm:$0xff] %v502
          %519 = vst [vmem:[#allocation2 + $0x60] sm:$0xff] %v503
          %520 = vst [vmem:[#allocation2 + $0x68] sm:$0xff] %v504
          %521 = vst [vmem:[#allocation2 + $0x70] sm:$0xff] %v505
          %522 = vst [vmem:[#allocation2 + $0x78] sm:$0xff] %v506
        $region44: #{tpu_custom_call.1} parent=39 // pred_fallthru
          _
        %s523 = sadd.s32 %s34, %s35
        %s524 = smul.u32 %s523, 3
        %s525 = sadd.s32 %s524, %s36
        %s526 = sld [smem:[#allocation4 + %s525]]
        %p527 = scmp.gt.s32.totalorder %s526, 0
        // Predicated region
        $region45: #{tpu_custom_call.1} parent=39 // pred_check
          %p528 = pneg %p527
        $region46: #{tpu_custom_call.1} parent=39 // pred_check_branch
          %530 = sbr.rel (%p528) target = $region48
        $region47: #{tpu_custom_call.1} parent=39 // pred_region
          %v531 = vld [vmem:[%s415] sm:$0x1]
          %v532 = vld [vmem:[%s465] sm:$0xf]
          %v533 = vld [vmem:[%s465 + $0x4] sm:$0xf]
          %v534 = vld [vmem:[%s465 + $0x8] sm:$0xf]
          %v535 = vld [vmem:[%s465 + $0xc] sm:$0xf]
          %v536 = vld [vmem:[%s465 + $0x10] sm:$0xf]
          %v537 = vld [vmem:[%s465 + $0x14] sm:$0xf]
          %v538 = vld [vmem:[%s465 + $0x18] sm:$0xf]
          %v539 = vld [vmem:[%s465 + $0x1c] sm:$0xf]
          %v540 = vld [vmem:[%s465 + $0x20] sm:$0xf]
          %v541 = vld [vmem:[%s465 + $0x24] sm:$0xf]
          %v542 = vld [vmem:[%s465 + $0x28] sm:$0xf]
          %v543 = vld [vmem:[%s465 + $0x2c] sm:$0xf]
          %v544 = vld [vmem:[%s465 + $0x30] sm:$0xf]
          %v545 = vld [vmem:[%s465 + $0x34] sm:$0xf]
          %v546 = vld [vmem:[%s465 + $0x38] sm:$0xf]
          %v547 = vld [vmem:[%s465 + $0x3c] sm:$0xf]
          %v548 = vunpack.c.l.bf16 %v532
          %v549 = vunpack.c.l.bf16 %v533
          %v550 = vunpack.c.l.bf16 %v534
          %v551 = vunpack.c.l.bf16 %v535
          %v552 = vunpack.c.l.bf16 %v536
          %v553 = vunpack.c.l.bf16 %v537
          %v554 = vunpack.c.l.bf16 %v538
          %v555 = vunpack.c.l.bf16 %v539
          %v556 = vunpack.c.l.bf16 %v540
          %v557 = vunpack.c.l.bf16 %v541
          %v558 = vunpack.c.l.bf16 %v542
          %v559 = vunpack.c.l.bf16 %v543
          %v560 = vunpack.c.l.bf16 %v544
          %v561 = vunpack.c.l.bf16 %v545
          %v562 = vunpack.c.l.bf16 %v546
          %v563 = vunpack.c.l.bf16 %v547
          %v565 = vlaneseq
          %v566 = vshrl.u32 %v565, 7
          %v567 = vsub.s32 0, %v566
          %v568 = vrot.slane %v531, %v567
          %v570 = vmul.f32 %v568, %v548
          %v571 = vmul.f32 %v568, %v549
          %v572 = vmul.f32 %v568, %v550
          %v573 = vmul.f32 %v568, %v551
          %v574 = vmul.f32 %v568, %v552
          %v575 = vmul.f32 %v568, %v553
          %v576 = vmul.f32 %v568, %v554
          %v577 = vmul.f32 %v568, %v555
          %v578 = vmul.f32 %v568, %v556
          %v579 = vmul.f32 %v568, %v557
          %v580 = vmul.f32 %v568, %v558
          %v581 = vmul.f32 %v568, %v559
          %v582 = vmul.f32 %v568, %v560
          %v583 = vmul.f32 %v568, %v561
          %v584 = vmul.f32 %v568, %v562
          %v585 = vmul.f32 %v568, %v563
          %s586 = scalar_lea.vmem %s415, 1
          %v587 = vld [vmem:[%s586] sm:$0x1]
          %s588 = scalar_lea.vmem %s465, 64
          %v589 = vld [vmem:[%s588] sm:$0xf]
          %v590 = vld [vmem:[%s588 + $0x4] sm:$0xf]
          %v591 = vld [vmem:[%s588 + $0x8] sm:$0xf]
          %v592 = vld [vmem:[%s588 + $0xc] sm:$0xf]
          %v593 = vld [vmem:[%s588 + $0x10] sm:$0xf]
          %v594 = vld [vmem:[%s588 + $0x14] sm:$0xf]
          %v595 = vld [vmem:[%s588 + $0x18] sm:$0xf]
          %v596 = vld [vmem:[%s588 + $0x1c] sm:$0xf]
          %v597 = vld [vmem:[%s588 + $0x20] sm:$0xf]
          %v598 = vld [vmem:[%s588 + $0x24] sm:$0xf]
          %v599 = vld [vmem:[%s588 + $0x28] sm:$0xf]
          %v600 = vld [vmem:[%s588 + $0x2c] sm:$0xf]
          %v601 = vld [vmem:[%s588 + $0x30] sm:$0xf]
          %v602 = vld [vmem:[%s588 + $0x34] sm:$0xf]
          %v603 = vld [vmem:[%s588 + $0x38] sm:$0xf]
          %v604 = vld [vmem:[%s588 + $0x3c] sm:$0xf]
          %v605 = vunpack.c.l.bf16 %v589
          %v606 = vunpack.c.l.bf16 %v590
          %v607 = vunpack.c.l.bf16 %v591
          %v608 = vunpack.c.l.bf16 %v592
          %v609 = vunpack.c.l.bf16 %v593
          %v610 = vunpack.c.l.bf16 %v594
          %v611 = vunpack.c.l.bf16 %v595
          %v612 = vunpack.c.l.bf16 %v596
          %v613 = vunpack.c.l.bf16 %v597
          %v614 = vunpack.c.l.bf16 %v598
          %v615 = vunpack.c.l.bf16 %v599
          %v616 = vunpack.c.l.bf16 %v600
          %v617 = vunpack.c.l.bf16 %v601
          %v618 = vunpack.c.l.bf16 %v602
          %v619 = vunpack.c.l.bf16 %v603
          %v620 = vunpack.c.l.bf16 %v604
          %v622 = vlaneseq
          %v623 = vshrl.u32 %v622, 7
          %v624 = vsub.s32 0, %v623
          %v625 = vrot.slane %v587, %v624
          %v627 = vmul.f32 %v625, %v605
          %v628 = vmul.f32 %v625, %v606
          %v629 = vmul.f32 %v625, %v607
          %v630 = vmul.f32 %v625, %v608
          %v631 = vmul.f32 %v625, %v609
          %v632 = vmul.f32 %v625, %v610
          %v633 = vmul.f32 %v625, %v611
          %v634 = vmul.f32 %v625, %v612
          %v635 = vmul.f32 %v625, %v613
          %v636 = vmul.f32 %v625, %v614
          %v637 = vmul.f32 %v625, %v615
          %v638 = vmul.f32 %v625, %v616
          %v639 = vmul.f32 %v625, %v617
          %v640 = vmul.f32 %v625, %v618
          %v641 = vmul.f32 %v625, %v619
          %v642 = vmul.f32 %v625, %v620
          %v643 = vadd.f32 %v570, %v627
          %v644 = vadd.f32 %v571, %v628
          %v645 = vadd.f32 %v572, %v629
          %v646 = vadd.f32 %v573, %v630
          %v647 = vadd.f32 %v574, %v631
          %v648 = vadd.f32 %v575, %v632
          %v649 = vadd.f32 %v576, %v633
          %v650 = vadd.f32 %v577, %v634
          %v651 = vadd.f32 %v578, %v635
          %v652 = vadd.f32 %v579, %v636
          %v653 = vadd.f32 %v580, %v637
          %v654 = vadd.f32 %v581, %v638
          %v655 = vadd.f32 %v582, %v639
          %v656 = vadd.f32 %v583, %v640
          %v657 = vadd.f32 %v584, %v641
          %v658 = vadd.f32 %v585, %v642
          %v659 = vld [vmem:[%s443] sm:$0xff]
          %v660 = vld [vmem:[%s443 + $0x8] sm:$0xff]
          %v661 = vld [vmem:[%s443 + $0x10] sm:$0xff]
          %v662 = vld [vmem:[%s443 + $0x18] sm:$0xff]
          %v663 = vunpack.c.l.s8.bf16 %v659
          %v664 = vunpack.c.h.s8.bf16 %v659
          %v665 = vunpack.c.l.s8.bf16 %v660
          %v666 = vunpack.c.h.s8.bf16 %v660
          %v667 = vunpack.c.l.s8.bf16 %v661
          %v668 = vunpack.c.h.s8.bf16 %v661
          %v669 = vunpack.c.l.s8.bf16 %v662
          %v670 = vunpack.c.h.s8.bf16 %v662
          %v671 = vpack.c.bf16 %v644, %v643
          %v672 = vpack.c.bf16 %v646, %v645
          %v673 = vpack.c.bf16 %v648, %v647
          %v674 = vpack.c.bf16 %v650, %v649
          %v675 = vpack.c.bf16 %v652, %v651
          %v676 = vpack.c.bf16 %v654, %v653
          %v677 = vpack.c.bf16 %v656, %v655
          %v678 = vpack.c.bf16 %v658, %v657
          %679 = vmatprep.subr.bf16.mxu0 0
          %680 = vmatpush1.bf16.msra.mxu0 %v671
          %681 = vmatprep.subr.bf16.mxu0 0
          %682 = vmatpush1.bf16.msra.mxu0 %v672
          %683 = vmatprep.subr.bf16.mxu0 0
          %684 = vmatpush1.bf16.msra.mxu0 %v673
          %685 = vmatprep.subr.bf16.mxu0 0
          %686 = vmatpush1.bf16.msra.mxu0 %v674
          %687 = vmatprep.subr.bf16.mxu0 0
          %688 = vmatpush1.bf16.msra.mxu0 %v675
          %689 = vmatprep.subr.bf16.mxu0 0
          %690 = vmatpush1.bf16.msra.mxu0 %v676
          %691 = vmatprep.subr.bf16.mxu0 0
          %692 = vmatpush1.bf16.msra.mxu0 %v677
          %693 = vmatprep.subr.bf16.mxu0 0
          %694 = vmatpush1.bf16.msra.mxu0 %v678
          %695 = vmatprep.subr.bf16.mxu0 0
          %696 = vmatpush1.bf16.msra.mxu0 0
          %697 = vmatprep.subr.bf16.mxu0 0
          %698 = vmatpush1.bf16.msra.mxu0 0
          %699 = vmatprep.subr.bf16.mxu0 0
          %700 = vmatpush1.bf16.msra.mxu0 0
          %701 = vmatprep.subr.bf16.mxu0 0
          %702 = vmatpush1.bf16.msra.mxu0 0
          %703 = vmatprep.subr.bf16.mxu0 0
          %704 = vmatpush1.bf16.msra.mxu0 0
          %705 = vmatprep.subr.bf16.mxu0 0
          %706 = vmatpush1.bf16.msra.mxu0 0
          %707 = vmatprep.subr.bf16.mxu0 0
          %708 = vmatpush1.bf16.msra.mxu0 0
          %709 = vmatprep.subr.bf16.mxu0 0
          %710 = vmatpush1.bf16.msra.mxu0 0
          %711 = vmatprep.mubr.bf16.mxu0 0
          %712 = vmatmul.mubr.bf16.gmra.mrb[0].mxu0 %v663
          %v713 = vpop.f32.mrb[0].mxu0
          %v714 = vadd.f32 0.0, %v713
          %v715 = vpop.f32.mrb[0].mxu0
          %v716 = vpop.f32.mrb[0].mxu0
          %v717 = vadd.f32 0.0, %v716
          %v718 = vpop.f32.mrb[0].mxu0
          %719 = vmatprep.mubr.bf16.mxu0 0
          %720 = vmatmul.mubr.bf16.gmra.mrb[0].mxu0 %v664
          %v721 = vpop.f32.mrb[0].mxu0
          %v722 = vadd.f32 0.0, %v721
          %v723 = vpop.f32.mrb[0].mxu0
          %v724 = vpop.f32.mrb[0].mxu0
          %v725 = vadd.f32 0.0, %v724
          %v726 = vpop.f32.mrb[0].mxu0
          %727 = vmatprep.mubr.bf16.mxu0 0
          %728 = vmatmul.mubr.bf16.gmra.mrb[0].mxu0 %v665
          %v729 = vpop.f32.mrb[0].mxu0
          %v730 = vadd.f32 0.0, %v729
          %v731 = vpop.f32.mrb[0].mxu0
          %v732 = vpop.f32.mrb[0].mxu0
          %v733 = vadd.f32 0.0, %v732
          %v734 = vpop.f32.mrb[0].mxu0
          %735 = vmatprep.mubr.bf16.mxu0 0
          %736 = vmatmul.mubr.bf16.gmra.mrb[0].mxu0 %v666
          %v737 = vpop.f32.mrb[0].mxu0
          %v738 = vadd.f32 0.0, %v737
          %v739 = vpop.f32.mrb[0].mxu0
          %v740 = vpop.f32.mrb[0].mxu0
          %v741 = vadd.f32 0.0, %v740
          %v742 = vpop.f32.mrb[0].mxu0
          %743 = vmatprep.mubr.bf16.mxu0 0
          %744 = vmatmul.mubr.bf16.gmra.mrb[0].mxu0 %v667
          %v745 = vpop.f32.mrb[0].mxu0
          %v746 = vadd.f32 0.0, %v745
          %v747 = vpop.f32.mrb[0].mxu0
          %v748 = vpop.f32.mrb[0].mxu0
          %v749 = vadd.f32 0.0, %v748
          %v750 = vpop.f32.mrb[0].mxu0
          %751 = vmatprep.mubr.bf16.mxu0 0
          %752 = vmatmul.mubr.bf16.gmra.mrb[0].mxu0 %v668
          %v753 = vpop.f32.mrb[0].mxu0
          %v754 = vadd.f32 0.0, %v753
          %v755 = vpop.f32.mrb[0].mxu0
          %v756 = vpop.f32.mrb[0].mxu0
          %v757 = vadd.f32 0.0, %v756
          %v758 = vpop.f32.mrb[0].mxu0
          %759 = vmatprep.mubr.bf16.mxu0 0
          %760 = vmatmul.mubr.bf16.gmra.mrb[0].mxu0 %v669
          %v761 = vpop.f32.mrb[0].mxu0
          %v762 = vadd.f32 0.0, %v761
          %v763 = vpop.f32.mrb[0].mxu0
          %v764 = vpop.f32.mrb[0].mxu0
          %v765 = vadd.f32 0.0, %v764
          %v766 = vpop.f32.mrb[0].mxu0
          %767 = vmatprep.mubr.bf16.mxu0 0
          %768 = vmatmul.mubr.bf16.gmra.mrb[0].mxu0 %v670
          %v769 = vpop.f32.mrb[0].mxu0
          %v770 = vadd.f32 0.0, %v769
          %v771 = vpop.f32.mrb[0].mxu0
          %v772 = vpop.f32.mrb[0].mxu0
          %v773 = vadd.f32 0.0, %v772
          %v774 = vpop.f32.mrb[0].mxu0
          %775 = vdwg.mxu0
          %v776 = vld [vmem:[#allocation2] sm:$0xff]
          %v777 = vld [vmem:[#allocation2 + $0x8] sm:$0xff]
          %v778 = vld [vmem:[#allocation2 + $0x10] sm:$0xff]
          %v779 = vld [vmem:[#allocation2 + $0x18] sm:$0xff]
          %v780 = vld [vmem:[#allocation2 + $0x20] sm:$0xff]
          %v781 = vld [vmem:[#allocation2 + $0x28] sm:$0xff]
          %v782 = vld [vmem:[#allocation2 + $0x30] sm:$0xff]
          %v783 = vld [vmem:[#allocation2 + $0x38] sm:$0xff]
          %v784 = vld [vmem:[#allocation2 + $0x40] sm:$0xff]
          %v785 = vld [vmem:[#allocation2 + $0x48] sm:$0xff]
          %v786 = vld [vmem:[#allocation2 + $0x50] sm:$0xff]
          %v787 = vld [vmem:[#allocation2 + $0x58] sm:$0xff]
          %v788 = vld [vmem:[#allocation2 + $0x60] sm:$0xff]
          %v789 = vld [vmem:[#allocation2 + $0x68] sm:$0xff]
          %v790 = vld [vmem:[#allocation2 + $0x70] sm:$0xff]
          %v791 = vld [vmem:[#allocation2 + $0x78] sm:$0xff]
          %v792 = vld [vmem:[%s475] sm:$0xff]
          %v793 = vld [vmem:[%s475 + $0x8] sm:$0xff]
          %v794 = vld [vmem:[%s475 + $0x10] sm:$0xff]
          %v795 = vld [vmem:[%s475 + $0x18] sm:$0xff]
          %v796 = vld [vmem:[%s475 + $0x20] sm:$0xff]
          %v797 = vld [vmem:[%s475 + $0x28] sm:$0xff]
          %v798 = vld [vmem:[%s475 + $0x30] sm:$0xff]
          %v799 = vld [vmem:[%s475 + $0x38] sm:$0xff]
          %v800 = vld [vmem:[%s475 + $0x40] sm:$0xff]
          %v801 = vld [vmem:[%s475 + $0x48] sm:$0xff]
          %v802 = vld [vmem:[%s475 + $0x50] sm:$0xff]
          %v803 = vld [vmem:[%s475 + $0x58] sm:$0xff]
          %v804 = vld [vmem:[%s475 + $0x60] sm:$0xff]
          %v805 = vld [vmem:[%s475 + $0x68] sm:$0xff]
          %v806 = vld [vmem:[%s475 + $0x70] sm:$0xff]
          %v807 = vld [vmem:[%s475 + $0x78] sm:$0xff]
          %809 = vset.pattern.permute.xlu0 0
          %810 = vperm.xlu0 %809, %v792
          %v811 = vpop.permute.xlu0 %810
          %814 = vset.pattern.permute.xlu0 0
          %815 = vperm.xlu0 %814, %v793
          %v816 = vpop.permute.xlu0 %815
          %819 = vset.pattern.permute.xlu0 0
          %820 = vperm.xlu0 %819, %v794
          %v821 = vpop.permute.xlu0 %820
          %824 = vset.pattern.permute.xlu0 0
          %825 = vperm.xlu0 %824, %v795
          %v826 = vpop.permute.xlu0 %825
          %829 = vset.pattern.permute.xlu0 0
          %830 = vperm.xlu0 %829, %v796
          %v831 = vpop.permute.xlu0 %830
          %834 = vset.pattern.permute.xlu0 0
          %835 = vperm.xlu0 %834, %v797
          %v836 = vpop.permute.xlu0 %835
          %839 = vset.pattern.permute.xlu0 0
          %840 = vperm.xlu0 %839, %v798
          %v841 = vpop.permute.xlu0 %840
          %844 = vset.pattern.permute.xlu0 0
          %845 = vperm.xlu0 %844, %v799
          %v846 = vpop.permute.xlu0 %845
          %849 = vset.pattern.permute.xlu0 0
          %850 = vperm.xlu0 %849, %v800
          %v851 = vpop.permute.xlu0 %850
          %854 = vset.pattern.permute.xlu0 0
          %855 = vperm.xlu0 %854, %v801
          %v856 = vpop.permute.xlu0 %855
          %859 = vset.pattern.permute.xlu0 0
          %860 = vperm.xlu0 %859, %v802
          %v861 = vpop.permute.xlu0 %860
          %864 = vset.pattern.permute.xlu0 0
          %865 = vperm.xlu0 %864, %v803
          %v866 = vpop.permute.xlu0 %865
          %869 = vset.pattern.permute.xlu0 0
          %870 = vperm.xlu0 %869, %v804
          %v871 = vpop.permute.xlu0 %870
          %874 = vset.pattern.permute.xlu0 0
          %875 = vperm.xlu0 %874, %v805
          %v876 = vpop.permute.xlu0 %875
          %879 = vset.pattern.permute.xlu0 0
          %880 = vperm.xlu0 %879, %v806
          %v881 = vpop.permute.xlu0 %880
          %884 = vset.pattern.permute.xlu0 0
          %885 = vperm.xlu0 %884, %v807
          %v886 = vpop.permute.xlu0 %885
          %v888 = vmul.f32 %v811, %v714
          %v889 = vmul.f32 %v816, %v717
          %v890 = vmul.f32 %v821, %v722
          %v891 = vmul.f32 %v826, %v725
          %v892 = vmul.f32 %v831, %v730
          %v893 = vmul.f32 %v836, %v733
          %v894 = vmul.f32 %v841, %v738
          %v895 = vmul.f32 %v846, %v741
          %v896 = vmul.f32 %v851, %v746
          %v897 = vmul.f32 %v856, %v749
          %v898 = vmul.f32 %v861, %v754
          %v899 = vmul.f32 %v866, %v757
          %v900 = vmul.f32 %v871, %v762
          %v901 = vmul.f32 %v876, %v765
          %v902 = vmul.f32 %v881, %v770
          %v903 = vmul.f32 %v886, %v773
          %v904 = vadd.f32 %v776, %v888
          %v905 = vadd.f32 %v777, %v889
          %v906 = vadd.f32 %v778, %v890
          %v907 = vadd.f32 %v779, %v891
          %v908 = vadd.f32 %v780, %v892
          %v909 = vadd.f32 %v781, %v893
          %v910 = vadd.f32 %v782, %v894
          %v911 = vadd.f32 %v783, %v895
          %v912 = vadd.f32 %v784, %v896
          %v913 = vadd.f32 %v785, %v897
          %v914 = vadd.f32 %v786, %v898
          %v915 = vadd.f32 %v787, %v899
          %v916 = vadd.f32 %v788, %v900
          %v917 = vadd.f32 %v789, %v901
          %v918 = vadd.f32 %v790, %v902
          %v919 = vadd.f32 %v791, %v903
          %920 = vst [vmem:[#allocation2] sm:$0xff] %v904
          %921 = vst [vmem:[#allocation2 + $0x8] sm:$0xff] %v905
          %922 = vst [vmem:[#allocation2 + $0x10] sm:$0xff] %v906
          %923 = vst [vmem:[#allocation2 + $0x18] sm:$0xff] %v907
          %924 = vst [vmem:[#allocation2 + $0x20] sm:$0xff] %v908
          %925 = vst [vmem:[#allocation2 + $0x28] sm:$0xff] %v909
          %926 = vst [vmem:[#allocation2 + $0x30] sm:$0xff] %v910
          %927 = vst [vmem:[#allocation2 + $0x38] sm:$0xff] %v911
          %928 = vst [vmem:[#allocation2 + $0x40] sm:$0xff] %v912
          %929 = vst [vmem:[#allocation2 + $0x48] sm:$0xff] %v913
          %930 = vst [vmem:[#allocation2 + $0x50] sm:$0xff] %v914
          %931 = vst [vmem:[#allocation2 + $0x58] sm:$0xff] %v915
          %932 = vst [vmem:[#allocation2 + $0x60] sm:$0xff] %v916
          %933 = vst [vmem:[#allocation2 + $0x68] sm:$0xff] %v917
          %934 = vst [vmem:[#allocation2 + $0x70] sm:$0xff] %v918
          %935 = vst [vmem:[#allocation2 + $0x78] sm:$0xff] %v919
        $region48: #{tpu_custom_call.1} parent=39 // pred_fallthru
          _
        %p936 = scmp.eq.s32.totalorder %s36, 2
        %p937 = pnand %p485, %p936
        %p938 = pneg %p937
        // Predicated region
        $region49: #{tpu_custom_call.1} parent=39 // pred_check
          _
        $region50: #{tpu_custom_call.1} parent=39 // pred_check_branch
          %940 = sbr.rel (%p937) target = $region52
        $region51: #{tpu_custom_call.1} parent=39 // pred_region
          %v941 = vld [vmem:[#allocation2] sm:$0xff]
          %v942 = vld [vmem:[#allocation2 + $0x8] sm:$0xff]
          %v943 = vld [vmem:[#allocation2 + $0x10] sm:$0xff]
          %v944 = vld [vmem:[#allocation2 + $0x18] sm:$0xff]
          %v945 = vld [vmem:[#allocation2 + $0x20] sm:$0xff]
          %v946 = vld [vmem:[#allocation2 + $0x28] sm:$0xff]
          %v947 = vld [vmem:[#allocation2 + $0x30] sm:$0xff]
          %v948 = vld [vmem:[#allocation2 + $0x38] sm:$0xff]
          %v949 = vld [vmem:[#allocation2 + $0x40] sm:$0xff]
          %v950 = vld [vmem:[#allocation2 + $0x48] sm:$0xff]
          %v951 = vld [vmem:[#allocation2 + $0x50] sm:$0xff]
          %v952 = vld [vmem:[#allocation2 + $0x58] sm:$0xff]
          %v953 = vld [vmem:[#allocation2 + $0x60] sm:$0xff]
          %v954 = vld [vmem:[#allocation2 + $0x68] sm:$0xff]
          %v955 = vld [vmem:[#allocation2 + $0x70] sm:$0xff]
          %v956 = vld [vmem:[#allocation2 + $0x78] sm:$0xff]
          %v957 = vmax.f32 %v941, 0.0
          %v958 = vmax.f32 %v942, 0.0
          %v959 = vmax.f32 %v943, 0.0
          %v960 = vmax.f32 %v944, 0.0
          %v961 = vmax.f32 %v945, 0.0
          %v962 = vmax.f32 %v946, 0.0
          %v963 = vmax.f32 %v947, 0.0
          %v964 = vmax.f32 %v948, 0.0
          %v965 = vmax.f32 %v949, 0.0
          %v966 = vmax.f32 %v950, 0.0
          %v967 = vmax.f32 %v951, 0.0
          %v968 = vmax.f32 %v952, 0.0
          %v969 = vmax.f32 %v953, 0.0
          %v970 = vmax.f32 %v954, 0.0
          %v971 = vmax.f32 %v955, 0.0
          %v972 = vmax.f32 %v956, 0.0
          %973 = vst [vmem:[#allocation6] sm:$0xff] %v957
          %974 = vst [vmem:[#allocation6 + $0x8] sm:$0xff] %v958
          %975 = vst [vmem:[#allocation6 + $0x10] sm:$0xff] %v959
          %976 = vst [vmem:[#allocation6 + $0x18] sm:$0xff] %v960
          %977 = vst [vmem:[#allocation6 + $0x20] sm:$0xff] %v961
          %978 = vst [vmem:[#allocation6 + $0x28] sm:$0xff] %v962
          %979 = vst [vmem:[#allocation6 + $0x30] sm:$0xff] %v963
          %980 = vst [vmem:[#allocation6 + $0x38] sm:$0xff] %v964
          %981 = vst [vmem:[#allocation6 + $0x40] sm:$0xff] %v965
          %982 = vst [vmem:[#allocation6 + $0x48] sm:$0xff] %v966
          %983 = vst [vmem:[#allocation6 + $0x50] sm:$0xff] %v967
          %984 = vst [vmem:[#allocation6 + $0x58] sm:$0xff] %v968
          %985 = vst [vmem:[#allocation6 + $0x60] sm:$0xff] %v969
          %986 = vst [vmem:[#allocation6 + $0x68] sm:$0xff] %v970
          %987 = vst [vmem:[#allocation6 + $0x70] sm:$0xff] %v971
          %988 = vst [vmem:[#allocation6 + $0x78] sm:$0xff] %v972
        $region52: #{tpu_custom_call.1} parent=39 // pred_fallthru
          _
        // Predicated region
        $region53: #{tpu_custom_call.1} parent=39 // pred_check
          %p989 = pneg %p234
        $region54: #{tpu_custom_call.1} parent=39 // pred_check_branch
          %991 = sbr.rel (%p989) target = $region56
        $region55: #{tpu_custom_call.1} parent=39 // pred_region
          %s992 = smul.u32 16, %s34
          %s994 = ssub.s32 2048, 2048
          %995 = vsyncadd [#allocation7], %s994
          %s996 = smul.addr %s992, 128
          %s997 = scalar_lea.hbm %s7, %s996
          %s998 = sshll.u32 [#allocation6], 4
          %s999 = int_to_ptr.vmem [resolvable:$true] %s998
          %1004 = dma.vmem_to_hbm [thread:$0]  %s999, 2048, %s997, [#allocation7], 128, 128, 8
        $region56: #{tpu_custom_call.1} parent=39 // pred_fallthru
          _
        // Predicated region
        $region57: #{tpu_custom_call.1} parent=39 // pred_check
          %p1005 = pneg %p234
        $region58: #{tpu_custom_call.1} parent=39 // pred_check_branch
          %1007 = sbr.rel (%p1005) target = $region60
        $region59: #{tpu_custom_call.1} parent=39 // pred_region
          %1008 = dma.done [#allocation7], 2048
        $region60: #{tpu_custom_call.1} parent=39 // pred_fallthru
          _
      $region40: #{tpu_custom_call.1} parent=5 // pred_fallthru
        _
      %p1009 = scmp.le.s32.totalorder 2, %s24
      // Predicated region
      $region61: #{tpu_custom_call.1} parent=5 // pred_check
        %p1010 = pneg %p1009
      $region62: #{tpu_custom_call.1} parent=5 // pred_check_branch
        %1012 = sbr.rel (%p1010) target = $region64
      $region63: #{tpu_custom_call.1} parent=5 // pred_region
        %s1013 = ssub.s32 %s24, 2
      $region64: #{tpu_custom_call.1} parent=5 // pred_fallthru
        _
    $region6: #{tpu_custom_call.1} parent=1 // loop_footer
      %s28 = sadd.s32 1, %s24
    $region7: #{tpu_custom_call.1} parent=1 // loop_footer_branch
      %23 = sbr.rel target = $region3
    $region8: #{tpu_custom_call.1} parent=1 // loop_exit
      _
    %1014 = vsyncpa [#allocation7], 1
    %s1015 = scalar_lea.sflag [#allocation7], 1
    %1016 = vsyncpa %s1015, 1

</llo_original>
